<compile_context>
chip_gen: v7x
topology: tpu7x:2x2x1
jax: 0.10.0
libtpu: 0.0.40
codegen_flags: <defaults>
</compile_context>

<pallas_src>
import functools

import jax
import jax.numpy as jnp
from jax import lax
from jax.experimental import pallas as pl
from jax.experimental.pallas import tpu as pltpu

LANE = 128

# VMEM budget for the double-buffered input tiles (2 inputs x 2 pipeline
# buffers).  32 MiB of tiles + a 48 MiB scoped-VMEM limit stays well under
# v7x's 64 MiB physical VMEM and comfortably inside v5e/v6e's 128 MiB.
_INPUT_TILE_VMEM_BUDGET = 32 * 1024 * 1024
_VMEM_LIMIT_BYTES = 48 * 1024 * 1024

# Below this many flat elements the fixed pallas_call launch/pipeline overhead
# dominates; XLA fuses all three sums into a single pass anyway.
_SMALL_INPUT_ELEMS = 64 * 1024

# block_rows is rounded to a multiple of 256 sublanes: a legal second-to-last
# block dim for f32 (8), bf16 (16) and int8/bool (32) inputs alike.
_ROW_ALIGN = 256
# Once the input is non-trivial, force at least two grid blocks so the
# "parallel" grid axis can shard across both TensorCores on v7x.
_MIN_ROWS_TO_SPLIT = 1024


def _tversky_partial_kernel(p_ref, t_ref, o_ref, *, last_block_valid_rows,
                            needs_mask):
    """Per-block lane partials: o[0] = [sum(p*t); sum(p); sum(t)] (f32, 128 lanes)."""
    p = p_ref[...].astype(jnp.float32)
    t = t_ref[...].astype(jnp.float32)

    def emit(pv, tv):
        # Sublane-only reductions; the cross-lane collapse happens once in the
        # tiny JAX combine so the grid axis stays fully parallel.
        o_ref[0, 0:1, :] = jnp.sum(pv * tv, axis=0, keepdims=True)
        o_ref[0, 1:2, :] = jnp.sum(pv, axis=0, keepdims=True)
        o_ref[0, 2:3, :] = jnp.sum(tv, axis=0, keepdims=True)

    # TODO(synk): for bf16/int8 inputs the sums could be offloaded to the MXU
    # via a ones-vector matmul if a bundle dump shows the VALU slot saturating
    # on v7x; the f32 path here is DMA-bound so it is left on the VPU.
    if not needs_mask:
        emit(p, t)
    else:
        # Only the last grid block is ragged; gate the iota+compare+where work
        # so every other block pays zero masking cost.
        i = pl.program_id(0)
        last = pl.num_programs(0) - 1

        @pl.when(i < last)
        def _():
            emit(p, t)

        @pl.when(i == last)
        def _():
            row = lax.broadcasted_iota(jnp.int32, p.shape, 0)
            valid = row < last_block_valid_rows  # trace-time constant
            emit(jnp.where(valid, p, 0.0), jnp.where(valid, t, 0.0))


def _flatten_native(x):
    """Flatten without a host-side dtype upcast copy."""
    x = jnp.reshape(x, (-1,))
    if x.dtype == jnp.bool_:
        # TODO(synk): if Mosaic accepts bool refs directly this extra HBM pass
        # over the mask can be dropped; int8 keeps DMA bytes minimal meanwhile.
        x = x.astype(jnp.int8)
    return x


def _combine(tp, sp, st, alpha, beta, smooth):
    fp = sp - tp
    fn = st - tp
    tversky_index = (tp + smooth) / (tp + alpha * fp + beta * fn + smooth)
    return 1.0 - tversky_index


def tversky_loss(y_pred, y_true, alpha=0.3, beta=0.7, smooth=1e-5,
                 min_pallas_elems=_SMALL_INPUT_ELEMS):
    """Pallas TPU implementation of TverskyLoss.forward."""
    p = _flatten_native(y_pred)
    t = _flatten_native(y_true)
    n = p.shape[0]

    # Small-input fast path: pallas_call launch overhead dominates below this.
    if n < min_pallas_elems:
        pf = p.astype(jnp.float32)
        tf = t.astype(jnp.float32)
        return _combine(jnp.sum(pf * tf), jnp.sum(pf), jnp.sum(tf),
                        alpha, beta, smooth)

    # Lane alignment.  Zero padding contributes nothing to any of the sums.
    # TODO(synk): when n % 128 != 0 this jnp.pad materialises a full copy of
    # both inputs before the kernel runs; a copy-free variant would stream the
    # flat 1-D arrays with a (block_rows*128,) BlockSpec and mask by flat
    # element index in the last block, but that relies on 1-D block layouts /
    # in-kernel reshapes not validated here, so the (rare) unaligned case
    # keeps the proven padded path.
    n_pad = pl.cdiv(n, LANE) * LANE
    if n_pad != n:
        p = jnp.pad(p, (0, n_pad - n))
        t = jnp.pad(t, (0, n_pad - n))
    rows = n_pad // LANE
    p2 = p.reshape(rows, LANE)  # free reshape (bitcast) when already aligned
    t2 = t.reshape(rows, LANE)

    # Block-row selection:
    #  * cap so (2 inputs x 2 pipeline buffers) fit the VMEM tile budget
    #  * for non-trivial inputs, guarantee >= 2 blocks (v7x dual-TC sharding)
    itemsize_sum = p2.dtype.itemsize + t2.dtype.itemsize
    max_rows = _INPUT_TILE_VMEM_BUDGET // (2 * LANE * itemsize_sum)
    max_rows = max(_ROW_ALIGN, (max_rows // _ROW_ALIGN) * _ROW_ALIGN)
    if rows <= _MIN_ROWS_TO_SPLIT:
        block_rows = rows  # single full-extent block: always layout-legal
    else:
        half = pl.cdiv(pl.cdiv(rows, 2), _ROW_ALIGN) * _ROW_ALIGN
        block_rows = min(max_rows, half)
    num_blocks = pl.cdiv(rows, block_rows)
    needs_mask = (rows % block_rows) != 0
    last_rows = rows - (num_blocks - 1) * block_rows

    kernel = functools.partial(
        _tversky_partial_kernel,
        last_block_valid_rows=last_rows,
        needs_mask=needs_mask)

    bytes_accessed = rows * LANE * itemsize_sum + num_blocks * 3 * LANE * 4
    cost = pl.CostEstimate(flops=4 * rows * LANE, transcendentals=0,
                           bytes_accessed=int(bytes_accessed))

    partials = pl.pallas_call(
        kernel,
        out_shape=jax.ShapeDtypeStruct((num_blocks, 3, LANE), jnp.float32),
        grid_spec=pltpu.PrefetchScalarGridSpec(
            num_scalar_prefetch=0,
            grid=(num_blocks,),
            in_specs=[
                pl.BlockSpec((block_rows, LANE), lambda i: (i, 0)),
                pl.BlockSpec((block_rows, LANE), lambda i: (i, 0)),
            ],
            out_specs=pl.BlockSpec((1, 3, LANE), lambda i: (i, 0, 0)),
        ),
        compiler_params=pltpu.CompilerParams(
            dimension_semantics=("parallel",),
            vmem_limit_bytes=_VMEM_LIMIT_BYTES),
        cost_estimate=cost,
    )(p2, t2)

    # Tiny final combine + Tversky formula outside the kernel.
    sums = jnp.sum(partials, axis=(0, 2))  # (3,)
    return _combine(sums[0], sums[1], sums[2], alpha, beta, smooth)


def tversky_loss_ref(y_pred, y_true, alpha=0.3, beta=0.7, smooth=1e-5):
    p = jnp.reshape(y_pred, (-1,)).astype(jnp.float32)
    t = jnp.reshape(y_true, (-1,)).astype(jnp.float32)
    tp = jnp.sum(p * t)
    return _combine(tp, jnp.sum(p), jnp.sum(t), alpha, beta, smooth)


if __name__ == "__main__":
    key = jax.random.PRNGKey(0)
    k1, k2, k3, k4, k5, k6 = jax.random.split(key, 6)

    # 1) Canonical small NCHW input (sigmoid predictions vs. binary masks),
    #    forced through the kernel path (single full-extent block).
    y_pred = jax.nn.sigmoid(jax.random.normal(k1, (2, 4, 16, 16), jnp.float32))
    y_true = (jax.random.uniform(k2, (2, 4, 16, 16)) > 0.5).astype(jnp.float32)
    loss = jax.block_until_ready(
        tversky_loss(y_pred, y_true, min_pallas_elems=0))
    ref = jax.block_until_ready(tversky_loss_ref(y_pred, y_true))
    assert jnp.allclose(loss, ref, rtol=1e-5, atol=1e-6), (loss, ref)

    # Same input through the default small-input JAX fast path.
    loss_fp = jax.block_until_ready(tversky_loss(y_pred, y_true))
    assert jnp.allclose(loss_fp, ref, rtol=1e-5, atol=1e-6), (loss_fp, ref)

    # 2) Lane-aligned input, large enough to split into 2 parallel blocks.
    n_even = 2048 * LANE
    yp2 = jax.nn.sigmoid(jax.random.normal(k3, (n_even,), jnp.float32))
    yt2 = (jax.random.uniform(k4, (n_even,)) > 0.5).astype(jnp.float32)
    loss2 = jax.block_until_ready(tversky_loss(yp2, yt2))
    ref2 = jax.block_until_ready(tversky_loss_ref(yp2, yt2))
    assert jnp.allclose(loss2, ref2, rtol=1e-5, atol=1e-6), (loss2, ref2)

    # 3) Lane-unaligned length + multi-block grid + masked ragged last block.
    n_odd = 1500 * LANE + 37
    yp3 = jax.nn.sigmoid(jax.random.normal(k5, (n_odd,), jnp.float32))
    yt3 = (jax.random.uniform(k6, (n_odd,)) > 0.5).astype(jnp.float32)
    loss3 = jax.block_until_ready(tversky_loss(yp3, yt3))
    ref3 = jax.block_until_ready(tversky_loss_ref(yp3, yt3))
    assert jnp.allclose(loss3, ref3, rtol=1e-5, atol=1e-6), (loss3, ref3)

    print("KERNEL_OK")
</pallas_src>

<mosaic_0001>
module attributes {stable_mosaic.version = 11 : i64} {
  func.func @_tversky_partial_kernel(%arg0: i32, %arg1: memref<16x128xf32, #tpu.memory_space<vmem>>, %arg2: memref<16x128xf32, #tpu.memory_space<vmem>>, %arg3: memref<1x3x128xf32, #tpu.memory_space<vmem>>) attributes {dimension_semantics = [#tpu.dimension_semantics<parallel>], iteration_bounds = array<i64: 1>, scalar_prefetch = 0 : i64, scratch_operands = 0 : i64, tpu.core_type = #tpu.core_type<tc>, window_params = [{transform_indices = @transform_0, window_bounds = array<i64: 16, 128>}, {transform_indices = @transform_1, window_bounds = array<i64: 16, 128>}, {transform_indices = @transform_2, window_bounds = array<i64: 1, 3, 128>}]} {
    %c0 = arith.constant 0 : index
    %c0_0 = arith.constant 0 : index
    %0 = vector.load %arg1[%c0, %c0_0] : memref<16x128xf32, #tpu.memory_space<vmem>>, vector<16x128xf32>
    %c0_1 = arith.constant 0 : index
    %c0_2 = arith.constant 0 : index
    %1 = vector.load %arg2[%c0_1, %c0_2] : memref<16x128xf32, #tpu.memory_space<vmem>>, vector<16x128xf32>
    %2 = arith.mulf %0, %1 : vector<16x128xf32>
    %cst = arith.constant dense<0.000000e+00> : vector<128xf32>
    %3 = vector.multi_reduction <add>, %2, %cst [0] : vector<16x128xf32> to vector<128xf32>
    %4 = vector.shape_cast %3 : vector<128xf32> to vector<1x128xf32>
    %c0_3 = arith.constant 0 : index
    %c0_4 = arith.constant 0 : index
    %c0_5 = arith.constant 0 : index
    %5 = vector.load %arg3[%c0_3, %c0_4, %c0_5] : memref<1x3x128xf32, #tpu.memory_space<vmem>>, vector<1x1x128xf32>
    %6 = vector.shape_cast %5 : vector<1x1x128xf32> to vector<1x128xf32>
    %7 = vector.shape_cast %4 : vector<1x128xf32> to vector<1x1x128xf32>
    tpu.vector_store %arg3[%c0_3, %c0_4, %c0_5], %7 {strides = array<i32>} : memref<1x3x128xf32, #tpu.memory_space<vmem>>, vector<1x1x128xf32>,
    %cst_6 = arith.constant dense<0.000000e+00> : vector<128xf32>
    %8 = vector.multi_reduction <add>, %0, %cst_6 [0] : vector<16x128xf32> to vector<128xf32>
    %9 = vector.shape_cast %8 : vector<128xf32> to vector<1x128xf32>
    %c0_7 = arith.constant 0 : index
    %c1 = arith.constant 1 : index
    %c0_8 = arith.constant 0 : index
    %10 = vector.load %arg3[%c0_7, %c1, %c0_8] : memref<1x3x128xf32, #tpu.memory_space<vmem>>, vector<1x1x128xf32>
    %11 = vector.shape_cast %10 : vector<1x1x128xf32> to vector<1x128xf32>
    %12 = vector.shape_cast %9 : vector<1x128xf32> to vector<1x1x128xf32>
    tpu.vector_store %arg3[%c0_7, %c1, %c0_8], %12 {strides = array<i32>} : memref<1x3x128xf32, #tpu.memory_space<vmem>>, vector<1x1x128xf32>,
    %cst_9 = arith.constant dense<0.000000e+00> : vector<128xf32>
    %13 = vector.multi_reduction <add>, %1, %cst_9 [0] : vector<16x128xf32> to vector<128xf32>
    %14 = vector.shape_cast %13 : vector<128xf32> to vector<1x128xf32>
    %c0_10 = arith.constant 0 : index
    %c2 = arith.constant 2 : index
    %c0_11 = arith.constant 0 : index
    %15 = vector.load %arg3[%c0_10, %c2, %c0_11] : memref<1x3x128xf32, #tpu.memory_space<vmem>>, vector<1x1x128xf32>
    %16 = vector.shape_cast %15 : vector<1x1x128xf32> to vector<1x128xf32>
    %17 = vector.shape_cast %14 : vector<1x128xf32> to vector<1x1x128xf32>
    tpu.vector_store %arg3[%c0_10, %c2, %c0_11], %17 {strides = array<i32>} : memref<1x3x128xf32, #tpu.memory_space<vmem>>, vector<1x1x128xf32>,
    return
  }
  func.func @transform_0(%arg0: i32) -> (i32, i32) {
    %c0_i32 = arith.constant 0 : i32
    %c0_i32_0 = arith.constant 0 : i32
    return %arg0, %c0_i32 : i32, i32
  }
  func.func @transform_1(%arg0: i32) -> (i32, i32) {
    %c0_i32 = arith.constant 0 : i32
    %c0_i32_0 = arith.constant 0 : i32
    return %arg0, %c0_i32 : i32, i32
  }
  func.func @transform_2(%arg0: i32) -> (i32, i32, i32) {
    %c0_i32 = arith.constant 0 : i32
    %c0_i32_0 = arith.constant 0 : i32
    %c0_i32_1 = arith.constant 0 : i32
    return %arg0, %c0_i32, %c0_i32_0 : i32, i32, i32
  }
}

</mosaic_0001>

<llo_original>
// kernel: tpu_custom_call.1
$region0: #{tpu_custom_call.1}
  #allocation0 [shape = 'u32[]', space=smem, size = 0x4, offset = 0x4, fixed_abs, tag = 'smem constant byte address 0x4 - core index']
  #allocation1 [shape = 'u32[144,128]{1,0:T(1,128)}', space=vmem, size = 0x12000, scoped, tag = 'internal scratch']
  %s0 = inlined_call_operand.hbm [shape: f32[16,128], index: 0, kind: input, shape index: {}]
  %s1 = inlined_call_operand.hbm [shape: f32[16,128], index: 1, kind: input, shape index: {}]
  %s2 = inlined_call_operand.vmem [shape: f32[1,3,128], index: 2, kind: output, shape index: {}]
  %s3 = sld [smem:[#allocation0]]
  $region26: #{tpu_custom_call.1} parent=0
    _
  %s5 = ssub.s32 1, %s3
  %s6 = scalar_select 0, %s5, %s3
  $region1: #{tpu_custom_call.1} parent=0
    #allocation2 [shape = 'u8[8192]{0}', space=vmem, size = 0x2000, scoped, tag = 'input window, operand 0, single buffered']
    #allocation3 [shape = 's32[1]{0}', space=sflag, size = 0x4, scoped, tag = 'scoped memory for tpu_custom_call.1']
    #allocation4 [shape = 'u8[8192]{0}', space=vmem, size = 0x2000, scoped, tag = 'input window, operand 1, single buffered']
    #allocation5 [shape = 's32[1]{0}', space=sflag, size = 0x4, scoped, tag = 'scoped memory for tpu_custom_call.1']
    %7 = vsyncpa [#allocation3], 0
    %8 = vsyncpa [#allocation5], 0
    // Predicated region
    $region2: #{tpu_custom_call.1} parent=1 // pred_check
      _
    $region3: #{tpu_custom_call.1} parent=1 // pred_check_branch
      %10 = sbr.rel (0) target = $region5
    $region4: #{tpu_custom_call.1} parent=1 // pred_region
      %s12 = ssub.s32 256, 256
      %13 = vsyncadd [#allocation3], %s12
      %s14 = sshll.u32 [#allocation2], 4
      %s15 = int_to_ptr.vmem [resolvable:$true] %s14
      %20 = dma.hbm_to_vmem [thread:$0]  %s0, 256, %s15, [#allocation3], 128, 128, 8
    $region5: #{tpu_custom_call.1} parent=1 // pred_fallthru
      _
    // Predicated region
    $region6: #{tpu_custom_call.1} parent=1 // pred_check
      _
    $region7: #{tpu_custom_call.1} parent=1 // pred_check_branch
      %22 = sbr.rel (0) target = $region9
    $region8: #{tpu_custom_call.1} parent=1 // pred_region
      %s24 = ssub.s32 256, 256
      %25 = vsyncadd [#allocation5], %s24
      %s26 = sshll.u32 [#allocation4], 4
      %s27 = int_to_ptr.vmem [resolvable:$true] %s26
      %32 = dma.hbm_to_vmem [thread:$0]  %s1, 256, %s27, [#allocation5], 128, 128, 8
    $region9: #{tpu_custom_call.1} parent=1 // pred_fallthru
      _
    // Predicated region
    $region10: #{tpu_custom_call.1} parent=1 // pred_check
      _
    $region11: #{tpu_custom_call.1} parent=1 // pred_check_branch
      %34 = sbr.rel (0) target = $region13
    $region12: #{tpu_custom_call.1} parent=1 // pred_region
      %35 = dma.done [#allocation3], 256
    $region13: #{tpu_custom_call.1} parent=1 // pred_fallthru
      _
    // Predicated region
    $region14: #{tpu_custom_call.1} parent=1 // pred_check
      _
    $region15: #{tpu_custom_call.1} parent=1 // pred_check_branch
      %37 = sbr.rel (0) target = $region17
    $region16: #{tpu_custom_call.1} parent=1 // pred_region
      %38 = dma.done [#allocation5], 256
    $region17: #{tpu_custom_call.1} parent=1 // pred_fallthru
      _
    %v39 = vld [vmem:[#allocation2] sm:$0xff]
    %v40 = vld [vmem:[#allocation2 + $0x8] sm:$0xff]
    %v41 = vld [vmem:[#allocation4] sm:$0xff]
    %v42 = vld [vmem:[#allocation4 + $0x8] sm:$0xff]
    %v43 = vmul.f32 %v39, %v41
    %v44 = vmul.f32 %v40, %v42
    %v45 = vadd.f32 %v43, %v44
    %v46 = vrot.slane %v45, 4
    %v47 = vadd.f32 %v45, %v46
    %v48 = vrot.slane %v47, 2
    %v49 = vadd.f32 %v47, %v48
    %v50 = vrot.slane %v49, 1
    %v51 = vadd.f32 %v49, %v50
    %52 = vst [vmem:[%s2] sm:$0x1] %v51
    %v53 = vadd.f32 %v39, %v40
    %v54 = vrot.slane %v53, 4
    %v55 = vadd.f32 %v53, %v54
    %v56 = vrot.slane %v55, 2
    %v57 = vadd.f32 %v55, %v56
    %v58 = vrot.slane %v57, 1
    %v59 = vadd.f32 %v57, %v58
    %60 = vst [vmem:[%s2 + $0x1] sm:$0x1] %v59
    %v61 = vadd.f32 %v41, %v42
    %v62 = vrot.slane %v61, 4
    %v63 = vadd.f32 %v61, %v62
    %v64 = vrot.slane %v63, 2
    %v65 = vadd.f32 %v63, %v64
    %v66 = vrot.slane %v65, 1
    %v67 = vadd.f32 %v65, %v66
    %68 = vst [vmem:[%s2 + $0x2] sm:$0x1] %v67
    // Predicated region
    $region18: #{tpu_custom_call.1} parent=1 // pred_check
      _
    $region19: #{tpu_custom_call.1} parent=1 // pred_check_branch
      %70 = sbr.rel (0) target = $region21
    $region20: #{tpu_custom_call.1} parent=1 // pred_region
      _
    $region21: #{tpu_custom_call.1} parent=1 // pred_fallthru
      _
    // Predicated region
    $region22: #{tpu_custom_call.1} parent=1 // pred_check
      _
    $region23: #{tpu_custom_call.1} parent=1 // pred_check_branch
      %72 = sbr.rel (0) target = $region25
    $region24: #{tpu_custom_call.1} parent=1 // pred_region
      _
    $region25: #{tpu_custom_call.1} parent=1 // pred_fallthru
      _
    %73 = vsyncpa [#allocation3], 1
    %74 = vsyncpa [#allocation5], 1

</llo_original>
